<compile_context>
chip_gen: v7x
topology: tpu7x:2x2x1
jax: 0.10.0
libtpu: 0.0.40
codegen_flags: <defaults>
</compile_context>

<pallas_src>
import functools

import jax
import jax.numpy as jnp
from jax.experimental import pallas as pl
from jax.experimental.pallas import tpu as pltpu

_LANES = 128
_MAX_BLOCK_ROWS = 8192            # (8192, 128) f32 = 4 MiB per input per buffer
_ACC_ROWS = 256                   # fixed f32 VMEM accumulators (128 KiB each)
_VMEM_LIMIT_BYTES = 32 * 1024 * 1024
_NUM_CORE_SPLITS = 2              # leading "parallel" axis (both TCs on v7x)


def _iou_sums_kernel(x_ref, t_ref, o_ref, inter_acc, total_acc, *,
                     rows, block_rows, grid_inner, fold, mask_needed):
    """Accumulate elementwise p*t and p+t; cross-lane reduce once per core.

    x_ref, t_ref : (block_rows, 128) VMEM tiles (logits / targets, native dtype)
    o_ref        : (1, 2) SMEM output row for this core: [inter_sum, total_sum]
    inter_acc, total_acc : (acc_rows, 128) f32 VMEM accumulators (acc_rows is
                           decoupled from block_rows; fold = block_rows // acc_rows)
    """
    c = pl.program_id(0)      # core-split index ("parallel")
    i = pl.program_id(1)      # row-block index within this split ("arbitrary")

    @pl.when(i == 0)
    def _init():
        inter_acc[...] = jnp.zeros_like(inter_acc)
        total_acc[...] = jnp.zeros_like(total_acc)

    p = jax.nn.sigmoid(x_ref[...].astype(jnp.float32))
    t = t_ref[...].astype(jnp.float32)

    acc_rows = inter_acc.shape[0]

    def _accumulate(p_v, t_v):
        prod = p_v * t_v
        tot = p_v + t_v
        if fold > 1:
            # Sublane-aligned fold into the fixed-size accumulators: pure VPU adds.
            prod = jnp.sum(prod.reshape(fold, acc_rows, _LANES), axis=0)
            tot = jnp.sum(tot.reshape(fold, acc_rows, _LANES), axis=0)
        inter_acc[...] += prod
        total_acc[...] += tot

    if mask_needed:
        b = c * grid_inner + i                  # logical (unclamped) block index
        valid_rows = rows - b * block_rows      # <= 0 for a fully-OOB clamped block

        @pl.when(valid_rows >= block_rows)
        def _full_block():
            _accumulate(p, t)

        @pl.when(valid_rows < block_rows)
        def _partial_block():
            # Mask BOTH p and t BEFORE multiply/add: padded VMEM may hold NaN.
            row_ids = jax.lax.broadcasted_iota(jnp.int32, (block_rows, _LANES), 0)
            valid = row_ids < valid_rows
            _accumulate(jnp.where(valid, p, 0.0), jnp.where(valid, t, 0.0))
    else:
        _accumulate(p, t)

    @pl.when(i == pl.num_programs(1) - 1)
    def _finalize():
        o_ref[0, 0] = jnp.sum(inter_acc[...])
        o_ref[0, 1] = jnp.sum(total_acc[...])


@functools.partial(jax.jit, static_argnames=("smooth", "max_block_rows"))
def iou_loss(inputs, targets, smooth=1, max_block_rows=_MAX_BLOCK_ROWS):
    """IoU loss matching the PyTorch forward.

    Note: like the PyTorch module, `smooth` is accepted but ignored (the
    module hardcodes 1e-6).  Targets may be passed in any dtype (bf16 / int8 /
    bool mask); they are cast to f32 inside the kernel, so keep them narrow to
    minimize HBM traffic.
    """
    del smooth
    x = inputs.reshape(-1)
    t = targets.reshape(-1)
    n = x.shape[0]

    n_main = (n // _LANES) * _LANES       # elements handled by the kernel
    inter = jnp.float32(0.0)
    total = jnp.float32(0.0)

    if n_main > 0:
        rows = n_main // _LANES
        if rows <= max_block_rows:
            block_rows = rows                       # block == full array extent
        else:
            block_rows = max(8, (max_block_rows // 8) * 8)   # multiple of 8

        total_blocks = pl.cdiv(rows, block_rows)
        num_splits = _NUM_CORE_SPLITS if total_blocks >= _NUM_CORE_SPLITS else 1
        grid_inner = pl.cdiv(total_blocks, num_splits)
        clamp_needed = (num_splits * grid_inner) != total_blocks
        # Mask needed iff any processed block extends past `rows`
        # (partial last block and/or a fully-OOB clamped block).
        mask_needed = (num_splits * grid_inner * block_rows) != rows

        # Accumulator rows are decoupled from block size when possible.
        if block_rows % _ACC_ROWS == 0:
            acc_rows = _ACC_ROWS
        else:
            acc_rows = block_rows
        fold = block_rows // acc_rows

        x_main = x if n_main == n else x[:n_main]
        t_main = t if n_main == n else t[:n_main]
        x2 = x_main.reshape(rows, _LANES)   # row-major reshape: no HBM copy
        t2 = t_main.reshape(rows, _LANES)

        kernel = functools.partial(
            _iou_sums_kernel,
            rows=rows, block_rows=block_rows, grid_inner=grid_inner,
            fold=fold, mask_needed=mask_needed)

        def in_map(c, i):
            b = c * grid_inner + i
            if clamp_needed:
                # Keep the DMA in bounds for the one fully-OOB logical block
                # (odd total_blocks split across 2 cores); the kernel masks it
                # to zero using the unclamped logical index.
                b = jnp.minimum(b, total_blocks - 1)
            return (b, 0)

        sums = pl.pallas_call(
            kernel,
            out_shape=jax.ShapeDtypeStruct((num_splits, 2), jnp.float32),
            grid_spec=pltpu.PrefetchScalarGridSpec(
                num_scalar_prefetch=0,
                grid=(num_splits, grid_inner),
                in_specs=[
                    pl.BlockSpec((block_rows, _LANES), in_map),
                    pl.BlockSpec((block_rows, _LANES), in_map),
                ],
                out_specs=pl.BlockSpec(
                    (1, 2), lambda c, i: (c, 0), memory_space=pltpu.SMEM),
                scratch_shapes=[
                    pltpu.VMEM((acc_rows, _LANES), jnp.float32),
                    pltpu.VMEM((acc_rows, _LANES), jnp.float32),
                ],
            ),
            compiler_params=pltpu.CompilerParams(
                dimension_semantics=("parallel", "arbitrary"),
                vmem_limit_bytes=_VMEM_LIMIT_BYTES),
        )(x2, t2)

        partial = jnp.sum(sums, axis=0)   # combine per-core partial sums
        inter = inter + partial[0]
        total = total + partial[1]

    if n_main < n:
        # <128 leftover elements: negligible, handled with plain jnp.
        p_tail = jax.nn.sigmoid(x[n_main:].astype(jnp.float32))
        t_tail = t[n_main:].astype(jnp.float32)
        inter = inter + jnp.sum(p_tail * t_tail)
        total = total + jnp.sum(p_tail + t_tail)

    union = total - inter
    iou = (inter + jnp.float32(1e-6)) / (union + jnp.float32(1e-6))
    return jnp.float32(1.0) - iou


def _iou_loss_ref(inputs, targets):
    p = jax.nn.sigmoid(inputs.astype(jnp.float32)).reshape(-1)
    t = targets.astype(jnp.float32).reshape(-1)
    inter = jnp.sum(p * t)
    total = jnp.sum(p + t)
    union = total - inter
    return 1.0 - (inter + 1e-6) / (union + 1e-6)


if __name__ == "__main__":
    key = jax.random.PRNGKey(0)
    k1, k2, k3, k4, k5, k6, k7, k8 = jax.random.split(key, 8)

    # 1) Main case: NCHW like the PyTorch module; logits + binary mask.
    inputs = jax.random.normal(k1, (2, 4, 16, 16), dtype=jnp.float32)
    targets = (jax.random.uniform(k2, (2, 4, 16, 16)) > 0.5).astype(jnp.float32)
    loss = jax.block_until_ready(iou_loss(inputs, targets))
    ref = jax.block_until_ready(_iou_loss_ref(inputs, targets))
    assert jnp.allclose(loss, ref, rtol=1e-5, atol=1e-5), (loss, ref)

    # 2) Odd shape (exercises the <128-element tail path), bf16 logits.
    x2 = jax.random.normal(k3, (2, 3, 23, 17), dtype=jnp.bfloat16)
    t2 = (jax.random.uniform(k4, (2, 3, 23, 17)) > 0.5).astype(jnp.float32)
    loss2 = jax.block_until_ready(iou_loss(x2, t2))
    ref2 = jax.block_until_ready(_iou_loss_ref(x2, t2))
    assert jnp.allclose(loss2, ref2, rtol=1e-3, atol=1e-3), (loss2, ref2)

    # 3) Non-multiple-of-128 element count with a single full-extent block.
    x3 = jax.random.normal(k5, (1, 1, 2049, 130), dtype=jnp.float32)
    t3 = (jax.random.uniform(k6, (1, 1, 2049, 130)) > 0.5).astype(jnp.float32)
    loss3 = jax.block_until_ready(iou_loss(x3, t3))
    ref3 = jax.block_until_ready(_iou_loss_ref(x3, t3))
    assert jnp.allclose(loss3, ref3, rtol=1e-4, atol=1e-5), (loss3, ref3)

    # 4) Multi-block + 2-way core split with an odd block count (exercises the
    #    partial-block mask AND the clamped fully-OOB block) at a small shape
    #    by shrinking the block size: rows=1200, block_rows=512 -> 3 blocks.
    x4 = jax.random.normal(k7, (2, 3, 160, 160), dtype=jnp.float32)
    t4 = (jax.random.uniform(k8, (2, 3, 160, 160)) > 0.5).astype(jnp.float32)
    loss4 = jax.block_until_ready(iou_loss(x4, t4, max_block_rows=512))
    ref4 = jax.block_until_ready(_iou_loss_ref(x4, t4))
    assert jnp.allclose(loss4, ref4, rtol=1e-4, atol=1e-5), (loss4, ref4)

    print("KERNEL_OK")
</pallas_src>

<mosaic_0001>
module attributes {stable_mosaic.version = 11 : i64} {
  func.func @_iou_sums_kernel(%arg0: i32, %arg1: i32, %arg2: memref<16x128xf32, #tpu.memory_space<vmem>>, %arg3: memref<16x128xf32, #tpu.memory_space<vmem>>, %arg4: memref<1x2xf32, #tpu.memory_space<smem>>, %arg5: memref<16x128xf32, #tpu.memory_space<vmem>>, %arg6: memref<16x128xf32, #tpu.memory_space<vmem>>) attributes {dimension_semantics = [#tpu.dimension_semantics<parallel>, #tpu.dimension_semantics<arbitrary>], iteration_bounds = array<i64: 1, 1>, scalar_prefetch = 0 : i64, scratch_operands = 2 : i64, tpu.core_type = #tpu.core_type<tc>, window_params = [{transform_indices = @transform_0, window_bounds = array<i64: 16, 128>}, {transform_indices = @transform_1, window_bounds = array<i64: 16, 128>}, {transform_indices = @transform_2, window_bounds = array<i64: 1, 2>}]} {
    %c0_i32 = arith.constant 0 : i32
    %0 = arith.cmpi eq, %arg1, %c0_i32 : i32
    %1 = arith.extui %0 : i1 to i32
    %c0_i32_0 = arith.constant 0 : i32
    %2 = arith.cmpi ne, %1, %c0_i32_0 : i32
    scf.if %2 {
      %cst_14 = arith.constant 0.000000e+00 : f32
      %21 = vector.broadcast %cst_14 : f32 to vector<16x128xf32>
      %c0_15 = arith.constant 0 : index
      %c0_16 = arith.constant 0 : index
      %22 = vector.load %arg5[%c0_15, %c0_16] : memref<16x128xf32, #tpu.memory_space<vmem>>, vector<16x128xf32>
      tpu.vector_store %arg5[%c0_15, %c0_16], %21 {strides = array<i32>} : memref<16x128xf32, #tpu.memory_space<vmem>>, vector<16x128xf32>,
      %cst_17 = arith.constant 0.000000e+00 : f32
      %23 = vector.broadcast %cst_17 : f32 to vector<16x128xf32>
      %c0_18 = arith.constant 0 : index
      %c0_19 = arith.constant 0 : index
      %24 = vector.load %arg6[%c0_18, %c0_19] : memref<16x128xf32, #tpu.memory_space<vmem>>, vector<16x128xf32>
      tpu.vector_store %arg6[%c0_18, %c0_19], %23 {strides = array<i32>} : memref<16x128xf32, #tpu.memory_space<vmem>>, vector<16x128xf32>,
    } else {
    }
    %c0 = arith.constant 0 : index
    %c0_1 = arith.constant 0 : index
    %3 = vector.load %arg2[%c0, %c0_1] : memref<16x128xf32, #tpu.memory_space<vmem>>, vector<16x128xf32>
    %4 = arith.negf %3 : vector<16x128xf32>
    %5 = math.exp %4 : vector<16x128xf32>
    %cst = arith.constant 1.000000e+00 : f32
    %6 = vector.broadcast %cst : f32 to vector<16x128xf32>
    %7 = arith.addf %6, %5 : vector<16x128xf32>
    %8 = arith.divf %6, %7 : vector<16x128xf32>
    %c0_2 = arith.constant 0 : index
    %c0_3 = arith.constant 0 : index
    %9 = vector.load %arg3[%c0_2, %c0_3] : memref<16x128xf32, #tpu.memory_space<vmem>>, vector<16x128xf32>
    %10 = arith.mulf %8, %9 : vector<16x128xf32>
    %11 = arith.addf %8, %9 : vector<16x128xf32>
    %c0_4 = arith.constant 0 : index
    %c0_5 = arith.constant 0 : index
    %12 = vector.load %arg5[%c0_4, %c0_5] : memref<16x128xf32, #tpu.memory_space<vmem>>, vector<16x128xf32>
    %13 = arith.addf %12, %10 : vector<16x128xf32>
    %c0_6 = arith.constant 0 : index
    %c0_7 = arith.constant 0 : index
    %14 = vector.load %arg5[%c0_6, %c0_7] : memref<16x128xf32, #tpu.memory_space<vmem>>, vector<16x128xf32>
    tpu.vector_store %arg5[%c0_6, %c0_7], %13 {strides = array<i32>} : memref<16x128xf32, #tpu.memory_space<vmem>>, vector<16x128xf32>,
    %c0_8 = arith.constant 0 : index
    %c0_9 = arith.constant 0 : index
    %15 = vector.load %arg6[%c0_8, %c0_9] : memref<16x128xf32, #tpu.memory_space<vmem>>, vector<16x128xf32>
    %16 = arith.addf %15, %11 : vector<16x128xf32>
    %c0_10 = arith.constant 0 : index
    %c0_11 = arith.constant 0 : index
    %17 = vector.load %arg6[%c0_10, %c0_11] : memref<16x128xf32, #tpu.memory_space<vmem>>, vector<16x128xf32>
    tpu.vector_store %arg6[%c0_10, %c0_11], %16 {strides = array<i32>} : memref<16x128xf32, #tpu.memory_space<vmem>>, vector<16x128xf32>,
    %c0_i32_12 = arith.constant 0 : i32
    %18 = arith.cmpi eq, %arg1, %c0_i32_12 : i32
    %19 = arith.extui %18 : i1 to i32
    %c0_i32_13 = arith.constant 0 : i32
    %20 = arith.cmpi ne, %19, %c0_i32_13 : i32
    scf.if %20 {
      %c0_14 = arith.constant 0 : index
      %c0_15 = arith.constant 0 : index
      %21 = vector.load %arg5[%c0_14, %c0_15] : memref<16x128xf32, #tpu.memory_space<vmem>>, vector<16x128xf32>
      %22 = vector.shape_cast %21 : vector<16x128xf32> to vector<1x16x128xf32>
      %cst_16 = arith.constant dense<0.000000e+00> : vector<1xf32>
      %23 = vector.multi_reduction <add>, %22, %cst_16 [1, 2] : vector<1x16x128xf32> to vector<1xf32>
      %24 = vector.shape_cast %23 : vector<1xf32> to vector<1x1x1xf32>
      %25 = vector.extract %24[0, 0, 0] : f32 from vector<1x1x1xf32>
      %c0_17 = arith.constant 0 : index
      %c0_18 = arith.constant 0 : index
      %26 = memref.load %arg4[%c0_17, %c0_18] : memref<1x2xf32, #tpu.memory_space<smem>>
      memref.store %25, %arg4[%c0_17, %c0_18] : memref<1x2xf32, #tpu.memory_space<smem>>
      %c0_19 = arith.constant 0 : index
      %c0_20 = arith.constant 0 : index
      %27 = vector.load %arg6[%c0_19, %c0_20] : memref<16x128xf32, #tpu.memory_space<vmem>>, vector<16x128xf32>
      %28 = vector.shape_cast %27 : vector<16x128xf32> to vector<1x16x128xf32>
      %cst_21 = arith.constant dense<0.000000e+00> : vector<1xf32>
      %29 = vector.multi_reduction <add>, %28, %cst_21 [1, 2] : vector<1x16x128xf32> to vector<1xf32>
      %30 = vector.shape_cast %29 : vector<1xf32> to vector<1x1x1xf32>
      %31 = vector.extract %30[0, 0, 0] : f32 from vector<1x1x1xf32>
      %c0_22 = arith.constant 0 : index
      %c1 = arith.constant 1 : index
      %32 = memref.load %arg4[%c0_22, %c1] : memref<1x2xf32, #tpu.memory_space<smem>>
      memref.store %31, %arg4[%c0_22, %c1] : memref<1x2xf32, #tpu.memory_space<smem>>
    } else {
    }
    return
  }
  func.func @transform_0(%arg0: i32, %arg1: i32) -> (i32, i32) {
    %c1_i32 = arith.constant 1 : i32
    %0 = arith.muli %arg0, %c1_i32 : i32
    %1 = arith.addi %0, %arg1 : i32
    %c0_i32 = arith.constant 0 : i32
    %c0_i32_0 = arith.constant 0 : i32
    return %1, %c0_i32 : i32, i32
  }
  func.func @transform_1(%arg0: i32, %arg1: i32) -> (i32, i32) {
    %c1_i32 = arith.constant 1 : i32
    %0 = arith.muli %arg0, %c1_i32 : i32
    %1 = arith.addi %0, %arg1 : i32
    %c0_i32 = arith.constant 0 : i32
    %c0_i32_0 = arith.constant 0 : i32
    return %1, %c0_i32 : i32, i32
  }
  func.func @transform_2(%arg0: i32, %arg1: i32) -> (i32, i32) {
    %c0_i32 = arith.constant 0 : i32
    %c0_i32_0 = arith.constant 0 : i32
    return %arg0, %c0_i32 : i32, i32
  }
}

</mosaic_0001>

<llo_original>
// kernel: iou_loss.1
$region0: #{iou_loss.1}
  #allocation0 [shape = 'u32[]', space=smem, size = 0x4, offset = 0x4, fixed_abs, tag = 'smem constant byte address 0x4 - core index']
  #allocation1 [shape = 'u32[144,128]{1,0:T(1,128)}', space=vmem, size = 0x12000, scoped, tag = 'internal scratch']
  #allocation2 [shape = 'f32[16,128]{1,0:T(8,128)}', space=vmem, size = 0x2000, scoped, tag = 'scratch operand']
  #allocation3 [shape = 'f32[16,128]{1,0:T(8,128)}', space=vmem, size = 0x2000, scoped, tag = 'scratch operand']
  %s0 = inlined_call_operand.vmem [shape: f32[16,128], index: 0, kind: input, shape index: {}]
  %s1 = inlined_call_operand.vmem [shape: f32[16,128], index: 1, kind: input, shape index: {}]
  %s2 = inlined_call_operand.vmem [shape: f32[1,2], index: 2, kind: output, shape index: {}]
  %s3 = sld [smem:[#allocation0]]
  $region26: #{iou_loss.1} parent=0
    _
  %s5 = ssub.s32 1, %s3
  %s6 = scalar_select 0, %s5, %s3
  $region1: #{iou_loss.1} parent=0
    #allocation4 [shape = 'u8[512]{0}', space=smem, size = 0x200, scoped, tag = 'output window, operand 0, single buffered']
    #allocation5 [shape = 's32[1]{0}', space=sflag, size = 0x4, scoped, tag = 'scoped memory for iou_loss.1']
    %7 = vsyncpa [#allocation5], 0
    // Predicated region
    $region2: #{iou_loss.1} parent=1 // pred_check
      _
    $region3: #{iou_loss.1} parent=1 // pred_check_branch
      %9 = sbr.rel (0) target = $region5
    $region4: #{iou_loss.1} parent=1 // pred_region
      %s10 = sadd.s32 0, 0
      %s11 = smul.u32 2, %s10
      %p12 = scmp.lt.s32.totalorder %s11, 1
      %s13 = scalar_select %p12, %s11, 1
      %s14 = smul.addr %s13, 8
      %s15 = scalar_lea.vmem %s0, %s14
      %s16 = sadd.s32 0, 0
      %s17 = smul.u32 2, %s16
    $region5: #{iou_loss.1} parent=1 // pred_fallthru
      _
    // Predicated region
    $region6: #{iou_loss.1} parent=1 // pred_check
      _
    $region7: #{iou_loss.1} parent=1 // pred_check_branch
      %19 = sbr.rel (0) target = $region9
    $region8: #{iou_loss.1} parent=1 // pred_region
      %s20 = sadd.s32 0, 0
      %s21 = smul.u32 2, %s20
      %p22 = scmp.lt.s32.totalorder %s21, 1
      %s23 = scalar_select %p22, %s21, 1
      %s24 = smul.addr %s23, 8
      %s25 = scalar_lea.vmem %s1, %s24
      %s26 = sadd.s32 0, 0
      %s27 = smul.u32 2, %s26
    $region9: #{iou_loss.1} parent=1 // pred_fallthru
      _
    %s28 = sadd.s32 0, 0
    %s29 = smul.u32 2, %s28
    %p30 = scmp.lt.s32.totalorder %s29, 1
    %s31 = scalar_select %p30, %s29, 1
    %s32 = smul.addr %s31, 8
    %s33 = scalar_lea.vmem %s0, %s32
    %s34 = sadd.s32 0, 0
    %s35 = smul.u32 2, %s34
    %p36 = scmp.lt.s32.totalorder %s35, 1
    %s37 = scalar_select %p36, %s35, 1
    %s38 = smul.addr %s37, 8
    %s39 = scalar_lea.vmem %s1, %s38
    %s40 = sadd.s32 0, 0
    %s41 = smul.u32 2, %s40
    %p42 = scmp.lt.s32.totalorder %s41, 1
    %s43 = scalar_select %p42, %s41, 1
    %s44 = smul.addr %s43, 8
    %s45 = scalar_lea.vmem %s0, %s44
    %s46 = sadd.s32 0, 0
    %s47 = smul.u32 2, %s46
    %s48 = sadd.s32 0, 0
    %s49 = smul.u32 2, %s48
    %p50 = scmp.lt.s32.totalorder %s49, 1
    %s51 = scalar_select %p50, %s49, 1
    %s52 = smul.addr %s51, 8
    %s53 = scalar_lea.vmem %s1, %s52
    %s54 = sadd.s32 0, 0
    %s55 = smul.u32 2, %s54
    %p56 = scmp.eq.s32.totalorder 0, 0
    // Predicated region
    $region10: #{iou_loss.1} parent=1 // pred_check
      %p57 = pneg %p56
    $region11: #{iou_loss.1} parent=1 // pred_check_branch
      %59 = sbr.rel (%p57) target = $region13
    $region12: #{iou_loss.1} parent=1 // pred_region
      %60 = vst [vmem:[#allocation2] sm:$0xff] 0.0
      %61 = vst [vmem:[#allocation2 + $0x8] sm:$0xff] 0.0
      %62 = vst [vmem:[#allocation3] sm:$0xff] 0.0
      %63 = vst [vmem:[#allocation3 + $0x8] sm:$0xff] 0.0
    $region13: #{iou_loss.1} parent=1 // pred_fallthru
      _
    %v64 = vld [vmem:[%s45] sm:$0xff]
    %v65 = vld [vmem:[%s45 + $0x8] sm:$0xff]
    %v66 = vxor.u32 %v64, 2147483648
    %v67 = vxor.u32 %v65, 2147483648
    %v68 = vmul.f32 %v66, 1.442695
    %v69 = vpow.pop %v68
    %v70 = vmul.f32 %v67, 1.442695
    %v71 = vpow.pop %v70
    %v72 = vadd.f32 %v69, 1.0
    %v73 = vadd.f32 %v71, 1.0
    %v74 = vrcp.pop %v72
    %v75 = vmul.f32 1.0, %v74
    %v76 = vrcp.pop %v73
    %v77 = vmul.f32 1.0, %v76
    %v78 = vld [vmem:[%s53] sm:$0xff]
    %v79 = vld [vmem:[%s53 + $0x8] sm:$0xff]
    %v80 = vmul.f32 %v75, %v78
    %v81 = vmul.f32 %v77, %v79
    %v82 = vadd.f32 %v75, %v78
    %v83 = vadd.f32 %v77, %v79
    %v84 = vld [vmem:[#allocation2] sm:$0xff]
    %v85 = vld [vmem:[#allocation2 + $0x8] sm:$0xff]
    %v86 = vadd.f32 %v84, %v80
    %v87 = vadd.f32 %v85, %v81
    %88 = vst [vmem:[#allocation2] sm:$0xff] %v86
    %89 = vst [vmem:[#allocation2 + $0x8] sm:$0xff] %v87
    %v90 = vld [vmem:[#allocation3] sm:$0xff]
    %v91 = vld [vmem:[#allocation3 + $0x8] sm:$0xff]
    %v92 = vadd.f32 %v90, %v82
    %v93 = vadd.f32 %v91, %v83
    %94 = vst [vmem:[#allocation3] sm:$0xff] %v92
    %95 = vst [vmem:[#allocation3 + $0x8] sm:$0xff] %v93
    // Predicated region
    $region14: #{iou_loss.1} parent=1 // pred_check
      %p96 = pneg %p56
    $region15: #{iou_loss.1} parent=1 // pred_check_branch
      %98 = sbr.rel (%p96) target = $region17
    $region16: #{iou_loss.1} parent=1 // pred_region
      %v99 = vld [vmem:[#allocation2] sm:$0xff]
      %v100 = vld [vmem:[#allocation2 + $0x8] sm:$0xff]
      %v101 = vadd.f32 %v99, %v100
      %102 = vadd.xlane.f32.xlu0 %v101
      %v103 = vpop.xlane.xlu0 %102
      %v104 = vrot.slane %v103, 4
      %v105 = vadd.f32 %v103, %v104
      %v106 = vrot.slane %v105, 2
      %v107 = vadd.f32 %v105, %v106
      %v108 = vrot.slane %v107, 1
      %v109 = vadd.f32 %v107, %v108
      %s110 = vtos %v109
      %s111 = scalar_lea.smem [#allocation4], 0
      %112 = sst [smem:[%s111]] %s110
      %v113 = vld [vmem:[#allocation3] sm:$0xff]
      %v114 = vld [vmem:[#allocation3 + $0x8] sm:$0xff]
      %v115 = vadd.f32 %v113, %v114
      %116 = vadd.xlane.f32.xlu0 %v115
      %v117 = vpop.xlane.xlu0 %116
      %v118 = vrot.slane %v117, 4
      %v119 = vadd.f32 %v117, %v118
      %v120 = vrot.slane %v119, 2
      %v121 = vadd.f32 %v119, %v120
      %v122 = vrot.slane %v121, 1
      %v123 = vadd.f32 %v121, %v122
      %s124 = vtos %v123
      %s125 = scalar_lea.smem [#allocation4], 1
      %126 = sst [smem:[%s125]] %s124
    $region17: #{iou_loss.1} parent=1 // pred_fallthru
      _
    // Predicated region
    $region18: #{iou_loss.1} parent=1 // pred_check
      _
    $region19: #{iou_loss.1} parent=1 // pred_check_branch
      %128 = sbr.rel (0) target = $region21
    $region20: #{iou_loss.1} parent=1 // pred_region
      %s130 = ssub.s32 16, 16
      %131 = vsyncadd [#allocation5], %s130
      %s133 = sshll.u32 %s2, 4
      %s134 = int_to_ptr.vmem [resolvable:$true] %s133
      %136 = dma.smem_to_vmem [#allocation4], 16, %s134, [#allocation5]
    $region21: #{iou_loss.1} parent=1 // pred_fallthru
      _
    // Predicated region
    $region22: #{iou_loss.1} parent=1 // pred_check
      _
    $region23: #{iou_loss.1} parent=1 // pred_check_branch
      %138 = sbr.rel (0) target = $region25
    $region24: #{iou_loss.1} parent=1 // pred_region
      %139 = dma.done [#allocation5], 16
    $region25: #{iou_loss.1} parent=1 // pred_fallthru
      _
    %140 = sfence
    %141 = vsyncpa [#allocation5], 1

</llo_original>
